<compile_context>
chip_gen: v7x
topology: tpu7x:2x2x1
jax: 0.10.0
libtpu: 0.0.40
codegen_flags: <defaults>
</compile_context>

<pallas_src>
import functools

import jax
import jax.numpy as jnp
from jax.experimental import pallas as pl
from jax.experimental.pallas import tpu as pltpu

_PI = 3.14159265  # same (truncated) constant as the PyTorch reference

_TD_CAP = 4096  # lanes per D tile (2 MiB f32 per buffer at TB=128)


def _round_up(x, m):
    return ((x + m - 1) // m) * m


def _cdiv(a, b):
    return (a + b - 1) // b


def _choose_tb(b):
    """Batch tile: multiple of 8 (or == b), no padding, and >=2 batch blocks
    whenever possible so both TensorCores get work on v7x."""
    if b <= 8:
        return b  # single block; block dim == full array dim is always legal
    n_blocks = max(2, _cdiv(b, 128))
    return _round_up(_cdiv(b, n_blocks), 8)


def _accumulate_lanes(term, acc_ref):
    """Accumulate a (TB, TD) tile (TD a multiple of 128) into a (TB, 128)
    accumulator using a pairwise tree of VPU adds (shallow dependency chain);
    the single XLU cross-lane reduce happens only once per row-tile."""
    td = term.shape[1]
    n = td // 128
    parts = [term[:, j * 128:(j + 1) * 128] for j in range(n)]
    while len(parts) > 1:
        merged = [parts[i] + parts[i + 1] for i in range(0, len(parts) - 1, 2)]
        if len(parts) & 1:
            merged.append(parts[-1])
        parts = merged
    acc_ref[...] += parts[0]


def _cauchy_kernel(x_ref, t_ref, s_ref, out_ref, acc_ref, *,
                   eps, d_actual, rem_d, per_row_scale, multi_tile):
    """Cauchy NLL per-sample row sums.

    per_row_scale: scale block is (TB, 1); log(pi*s) / 1/s^2 hoisted per row.
    multi_tile:    D axis is tiled (td multiple of 128); output-resident
                   accumulator across the D grid axis.
    rem_d:         number of valid lanes in the tail D tile (0 if exact).
    """
    k = pl.program_id(1)
    nk = pl.num_programs(1)

    x = x_ref[...].astype(jnp.float32)
    t = t_ref[...].astype(jnp.float32)
    diff = x - t
    s = jnp.maximum(s_ref[...].astype(jnp.float32), jnp.float32(eps))

    if per_row_scale:
        inv_s2 = 1.0 / (s * s)                                  # (TB,1), per-row
        term = jnp.log(1.0 + diff * diff * inv_s2)              # one log / element

        def finalize(row_sum):
            return row_sum + jnp.float32(d_actual) * jnp.log(jnp.float32(_PI) * s)
    else:
        # log(pi*s) + log(1 + diff^2/s^2) == log(pi * (s + diff^2 / s))
        term = jnp.log(jnp.float32(_PI) * (s + diff * diff / s))

        def finalize(row_sum):
            return row_sum

    if not multi_tile:
        # Single D tile covering exactly d lanes: no accumulator, no masking.
        out_ref[...] = finalize(jnp.sum(term, axis=1, keepdims=True))
    else:
        @pl.when(k == 0)
        def _():
            acc_ref[...] = jnp.zeros_like(acc_ref)

        if rem_d:
            # Mask garbage lanes only on the tail tile (all other tiles unmasked).
            @pl.when(k != nk - 1)
            def _():
                _accumulate_lanes(term, acc_ref)

            @pl.when(k == nk - 1)
            def _():
                col = jax.lax.broadcasted_iota(jnp.int32, term.shape, 1)
                masked = jnp.where(col < rem_d, term, jnp.float32(0.0))
                _accumulate_lanes(masked, acc_ref)
        else:
            _accumulate_lanes(term, acc_ref)

        @pl.when(k == nk - 1)
        def _():
            out_ref[...] = finalize(jnp.sum(acc_ref[...], axis=1, keepdims=True))


def cauchy_nll(input_arr, target_arr, scale_arr, eps=1e-6, reduction="mean"):
    """JAX/Pallas equivalent of Custom_Cauchy.forward."""
    b = input_arr.shape[0]
    x = input_arr.reshape(b, -1)
    t = target_arr.reshape(b, -1)
    if x.shape != t.shape:
        raise ValueError("input and target must have same size")
    d = x.shape[1]

    s = scale_arr.reshape(b, -1)
    if s.shape[1] != d and s.shape[1] != 1:
        raise ValueError("scale is of incorrect size")
    if reduction not in ("none", "mean", "sum"):
        raise ValueError(reduction + " is not valid")
    # TODO(synk): the PyTorch module raises on any negative scale entry; a
    # data-dependent raise is not expressible inside a jitted Pallas kernel,
    # so negative values are clamped to eps (like the no_grad clamp).

    per_row_scale = (s.shape[1] == 1) and (d != 1)

    # --- tiling: no wrapper padding; partial tail blocks handled in-kernel ---
    tb = _choose_tb(b)
    if d <= _TD_CAP:
        td = d                    # single D tile, exact width (no masking needed)
        multi_tile = False
        rem_d = 0
    else:
        td = _TD_CAP              # multiple of 128
        multi_tile = True
        rem_d = d % td            # valid lanes in the tail tile (0 if exact)
    grid = (_cdiv(b, tb), _cdiv(d, td))

    itemsize = jnp.dtype(x.dtype).itemsize
    n_big_streams = 2 if per_row_scale else 3
    vmem_needed = (2 * n_big_streams * tb * td * itemsize   # double-buffered inputs
                   + 2 * tb * 4                             # output blocks
                   + tb * 128 * 4                           # scratch accumulator
                   + 2 * tb * itemsize)                     # (B,1) scale blocks
    vmem_limit = int(min(max(vmem_needed + (8 << 20), 32 << 20), 64 << 20))

    kernel = functools.partial(
        _cauchy_kernel, eps=eps, d_actual=d, rem_d=rem_d,
        per_row_scale=per_row_scale, multi_tile=multi_tile)

    if per_row_scale:
        # (B,1) scale stays a (TB,1) block — no full-size third HBM stream.
        scale_spec = pl.BlockSpec((tb, 1), lambda i, k: (i, 0))
        scale_in = s
        flops = 5 * b * d
    else:
        scale_spec = pl.BlockSpec((tb, td), lambda i, k: (i, k))
        scale_in = s
        flops = 6 * b * d

    per_sample = pl.pallas_call(
        kernel,
        out_shape=jax.ShapeDtypeStruct((b, 1), jnp.float32),
        grid=grid,
        in_specs=[
            pl.BlockSpec((tb, td), lambda i, k: (i, k)),
            pl.BlockSpec((tb, td), lambda i, k: (i, k)),
            scale_spec,
        ],
        out_specs=pl.BlockSpec((tb, 1), lambda i, k: (i, 0)),
        scratch_shapes=[pltpu.VMEM((tb, 128), jnp.float32)],
        compiler_params=pltpu.CompilerParams(
            dimension_semantics=("parallel", "arbitrary"),
            vmem_limit_bytes=vmem_limit),
        cost_estimate=pl.CostEstimate(
            flops=int(flops),
            transcendentals=int(b * d),
            bytes_accessed=int(n_big_streams * b * d * itemsize + 4 * b)),
    )(x, t, scale_in)

    loss = per_sample[:, 0]  # (B,)
    if reduction == "mean":
        return jnp.mean(loss)
    elif reduction == "sum":
        return jnp.sum(loss)
    return loss


if __name__ == "__main__":
    key = jax.random.PRNGKey(0)
    k1, k2, k3, k4 = jax.random.split(key, 4)

    def ref_loss(i_, t_, s_, reduction, eps=1e-6):
        bb = i_.shape[0]
        xr = i_.reshape(bb, -1).astype(jnp.float32)
        tr = t_.reshape(bb, -1).astype(jnp.float32)
        sr = jnp.maximum(s_.reshape(bb, -1).astype(jnp.float32), eps)
        term = jnp.log(_PI * sr) + jnp.log(1.0 + (xr - tr) ** 2 / sr ** 2)
        loss = jnp.sum(term, axis=1)
        if reduction == "mean":
            return jnp.mean(loss)
        if reduction == "sum":
            return jnp.sum(loss)
        return loss

    # Case 1: small NCHW, D = 4*16*16 = 1024 (single D tile, single batch block).
    B, C, H, W = 2, 4, 16, 16
    inp = jax.random.normal(k1, (B, C, H, W), dtype=jnp.float32)
    tgt = jax.random.normal(k2, (B, C, H, W), dtype=jnp.float32)
    scale_full = jax.nn.softplus(jax.random.normal(k3, (B, C, H, W), dtype=jnp.float32))
    scale_row = jax.nn.softplus(jax.random.normal(k4, (B, 1), dtype=jnp.float32))

    out = jax.block_until_ready(cauchy_nll(inp, tgt, scale_full, reduction="mean"))
    ref = ref_loss(inp, tgt, scale_full, "mean")
    assert jnp.allclose(out, ref, rtol=1e-4, atol=1e-4), (out, ref)

    out = jax.block_until_ready(cauchy_nll(inp, tgt, scale_row, reduction="mean"))
    ref = ref_loss(inp, tgt, scale_row, "mean")
    assert jnp.allclose(out, ref, rtol=1e-4, atol=1e-4), (out, ref)

    out = jax.block_until_ready(cauchy_nll(inp, tgt, scale_full, reduction="none"))
    ref = ref_loss(inp, tgt, scale_full, "none")
    assert jnp.allclose(out, ref, rtol=1e-4, atol=1e-4), (out, ref)

    # Case 2: ragged shapes — D = 6*30*30 = 5400 (> 4096 -> tiled D with masked
    # tail tile) and B = 10 (two batch blocks, second one partial).
    B2, C2, H2, W2 = 10, 6, 30, 30
    kk = jax.random.split(jax.random.PRNGKey(1), 4)
    inp2 = jax.random.normal(kk[0], (B2, C2, H2, W2), dtype=jnp.float32)
    tgt2 = jax.random.normal(kk[1], (B2, C2, H2, W2), dtype=jnp.float32)
    sc2_full = jax.nn.softplus(jax.random.normal(kk[2], (B2, C2, H2, W2), dtype=jnp.float32))
    sc2_row = jax.nn.softplus(jax.random.normal(kk[3], (B2, 1), dtype=jnp.float32))

    out = jax.block_until_ready(cauchy_nll(inp2, tgt2, sc2_full, reduction="none"))
    ref = ref_loss(inp2, tgt2, sc2_full, "none")
    assert jnp.allclose(out, ref, rtol=1e-4, atol=1e-4), (out, ref)

    out = jax.block_until_ready(cauchy_nll(inp2, tgt2, sc2_row, reduction="sum"))
    ref = ref_loss(inp2, tgt2, sc2_row, "sum")
    assert jnp.allclose(out, ref, rtol=1e-4, atol=1e-4), (out, ref)

    print("KERNEL_OK")
</pallas_src>

<mosaic_0001>
module attributes {stable_mosaic.version = 11 : i64} {
  func.func @_cauchy_kernel(%arg0: i32, %arg1: i32, %arg2: memref<2x1024xf32, #tpu.memory_space<vmem>>, %arg3: memref<2x1024xf32, #tpu.memory_space<vmem>>, %arg4: memref<2x1024xf32, #tpu.memory_space<vmem>>, %arg5: memref<2x1xf32, #tpu.memory_space<vmem>>, %arg6: memref<2x128xf32, #tpu.memory_space<vmem>>) attributes {dimension_semantics = [#tpu.dimension_semantics<parallel>, #tpu.dimension_semantics<arbitrary>], iteration_bounds = array<i64: 1, 1>, scalar_prefetch = 0 : i64, scratch_operands = 1 : i64, tpu.core_type = #tpu.core_type<tc>, window_params = [{transform_indices = @transform_0, window_bounds = array<i64: 2, 1024>}, {transform_indices = @transform_1, window_bounds = array<i64: 2, 1024>}, {transform_indices = @transform_2, window_bounds = array<i64: 2, 1024>}, {transform_indices = @transform_3, window_bounds = array<i64: 2, 1>}]} {
    %c0 = arith.constant 0 : index
    %c0_0 = arith.constant 0 : index
    %0 = vector.load %arg2[%c0, %c0_0] : memref<2x1024xf32, #tpu.memory_space<vmem>>, vector<2x1024xf32>
    %c0_1 = arith.constant 0 : index
    %c0_2 = arith.constant 0 : index
    %1 = vector.load %arg3[%c0_1, %c0_2] : memref<2x1024xf32, #tpu.memory_space<vmem>>, vector<2x1024xf32>
    %2 = arith.subf %0, %1 : vector<2x1024xf32>
    %c0_3 = arith.constant 0 : index
    %c0_4 = arith.constant 0 : index
    %3 = vector.load %arg4[%c0_3, %c0_4] : memref<2x1024xf32, #tpu.memory_space<vmem>>, vector<2x1024xf32>
    %cst = arith.constant 9.99999997E-7 : f32
    %4 = vector.broadcast %cst : f32 to vector<2x1024xf32>
    %5 = arith.maximumf %3, %4 : vector<2x1024xf32>
    %6 = arith.mulf %2, %2 : vector<2x1024xf32>
    %7 = arith.divf %6, %5 : vector<2x1024xf32>
    %8 = arith.addf %5, %7 : vector<2x1024xf32>
    %cst_5 = arith.constant 3.14159274 : f32
    %9 = vector.broadcast %cst_5 : f32 to vector<2x1024xf32>
    %10 = arith.mulf %9, %8 : vector<2x1024xf32>
    %11 = math.log %10 : vector<2x1024xf32>
    %cst_6 = arith.constant dense<0.000000e+00> : vector<2xf32>
    %12 = vector.multi_reduction <add>, %11, %cst_6 [1] : vector<2x1024xf32> to vector<2xf32>
    %13 = vector.shape_cast %12 : vector<2xf32> to vector<2x1xf32>
    %c0_7 = arith.constant 0 : index
    %c0_8 = arith.constant 0 : index
    %14 = vector.load %arg5[%c0_7, %c0_8] : memref<2x1xf32, #tpu.memory_space<vmem>>, vector<2x1xf32>
    tpu.vector_store %arg5[%c0_7, %c0_8], %13 {strides = array<i32>} : memref<2x1xf32, #tpu.memory_space<vmem>>, vector<2x1xf32>,
    return
  }
  func.func @transform_0(%arg0: i32, %arg1: i32) -> (i32, i32) {
    %c0_i32 = arith.constant 0 : i32
    return %arg0, %arg1 : i32, i32
  }
  func.func @transform_1(%arg0: i32, %arg1: i32) -> (i32, i32) {
    %c0_i32 = arith.constant 0 : i32
    return %arg0, %arg1 : i32, i32
  }
  func.func @transform_2(%arg0: i32, %arg1: i32) -> (i32, i32) {
    %c0_i32 = arith.constant 0 : i32
    return %arg0, %arg1 : i32, i32
  }
  func.func @transform_3(%arg0: i32, %arg1: i32) -> (i32, i32) {
    %c0_i32 = arith.constant 0 : i32
    %c0_i32_0 = arith.constant 0 : i32
    return %arg0, %c0_i32 : i32, i32
  }
}

</mosaic_0001>

<llo_original>
// kernel: tpu_custom_call.1
$region0: #{tpu_custom_call.1}
  #allocation0 [shape = 'u32[]', space=smem, size = 0x4, offset = 0x4, fixed_abs, tag = 'smem constant byte address 0x4 - core index']
  #allocation1 [shape = 'u32[144,128]{1,0:T(1,128)}', space=vmem, size = 0x12000, scoped, tag = 'internal scratch']
  #allocation2 [shape = 'f32[2,128]{1,0:T(2,128)}', space=vmem, size = 0x400, scoped, tag = 'scratch operand']
  %s0 = inlined_call_operand.hbm [shape: f32[2,1024], index: 0, kind: input, shape index: {}]
  %s1 = inlined_call_operand.hbm [shape: f32[2,1024], index: 1, kind: input, shape index: {}]
  %s2 = inlined_call_operand.hbm [shape: f32[2,1024], index: 2, kind: input, shape index: {}]
  %s3 = inlined_call_operand.vmem [shape: f32[2,1], index: 3, kind: output, shape index: {}]
  %s4 = sld [smem:[#allocation0]]
  $region34: #{tpu_custom_call.1} parent=0
    _
  %s6 = ssub.s32 1, %s4
  %s7 = scalar_select 0, %s6, %s4
  $region1: #{tpu_custom_call.1} parent=0
    #allocation3 [shape = 'u8[8192]{0}', space=vmem, size = 0x2000, scoped, tag = 'input window, operand 0, single buffered']
    #allocation4 [shape = 's32[1]{0}', space=sflag, size = 0x4, scoped, tag = 'scoped memory for tpu_custom_call.1']
    #allocation5 [shape = 'u8[8192]{0}', space=vmem, size = 0x2000, scoped, tag = 'input window, operand 1, single buffered']
    #allocation6 [shape = 's32[1]{0}', space=sflag, size = 0x4, scoped, tag = 'scoped memory for tpu_custom_call.1']
    #allocation7 [shape = 'u8[8192]{0}', space=vmem, size = 0x2000, scoped, tag = 'input window, operand 2, single buffered']
    %8 = vsyncpa [#allocation4], 0
    %9 = vsyncpa [#allocation6], 0
    // Predicated region
    $region2: #{tpu_custom_call.1} parent=1 // pred_check
      _
    $region3: #{tpu_custom_call.1} parent=1 // pred_check_branch
      %11 = sbr.rel (0) target = $region5
    $region4: #{tpu_custom_call.1} parent=1 // pred_region
      %s13 = ssub.s32 256, 256
      %14 = vsyncadd [#allocation4], %s13
      %s16 = sshll.u32 [#allocation3], 4
      %s17 = int_to_ptr.vmem [resolvable:$true] %s16
      %19 = dma.hbm_to_vmem [thread:$0]  %s0, 256, %s17, [#allocation4]
    $region5: #{tpu_custom_call.1} parent=1 // pred_fallthru
      _
    // Predicated region
    $region6: #{tpu_custom_call.1} parent=1 // pred_check
      _
    $region7: #{tpu_custom_call.1} parent=1 // pred_check_branch
      %21 = sbr.rel (0) target = $region9
    $region8: #{tpu_custom_call.1} parent=1 // pred_region
      %s23 = ssub.s32 256, 256
      %24 = vsyncadd [#allocation6], %s23
      %s26 = sshll.u32 [#allocation5], 4
      %s27 = int_to_ptr.vmem [resolvable:$true] %s26
      %29 = dma.hbm_to_vmem [thread:$0]  %s1, 256, %s27, [#allocation6]
    $region9: #{tpu_custom_call.1} parent=1 // pred_fallthru
      _
    // Predicated region
    $region10: #{tpu_custom_call.1} parent=1 // pred_check
      _
    $region11: #{tpu_custom_call.1} parent=1 // pred_check_branch
      %31 = sbr.rel (0) target = $region13
    $region12: #{tpu_custom_call.1} parent=1 // pred_region
      %s33 = ssub.s32 256, 256
      %34 = vsyncadd [#allocation6], %s33
      %s36 = sshll.u32 [#allocation7], 4
      %s37 = int_to_ptr.vmem [resolvable:$true] %s36
      %39 = dma.hbm_to_vmem [thread:$0]  %s2, 256, %s37, [#allocation6]
    $region13: #{tpu_custom_call.1} parent=1 // pred_fallthru
      _
    // Predicated region
    $region14: #{tpu_custom_call.1} parent=1 // pred_check
      _
    $region15: #{tpu_custom_call.1} parent=1 // pred_check_branch
      %41 = sbr.rel (0) target = $region17
    $region16: #{tpu_custom_call.1} parent=1 // pred_region
      %42 = dma.done [#allocation4], 256
    $region17: #{tpu_custom_call.1} parent=1 // pred_fallthru
      _
    // Predicated region
    $region18: #{tpu_custom_call.1} parent=1 // pred_check
      _
    $region19: #{tpu_custom_call.1} parent=1 // pred_check_branch
      %44 = sbr.rel (0) target = $region21
    $region20: #{tpu_custom_call.1} parent=1 // pred_region
      %45 = dma.done [#allocation6], 256
    $region21: #{tpu_custom_call.1} parent=1 // pred_fallthru
      _
    // Predicated region
    $region22: #{tpu_custom_call.1} parent=1 // pred_check
      _
    $region23: #{tpu_custom_call.1} parent=1 // pred_check_branch
      %47 = sbr.rel (0) target = $region25
    $region24: #{tpu_custom_call.1} parent=1 // pred_region
      %48 = dma.done [#allocation6], 256
    $region25: #{tpu_custom_call.1} parent=1 // pred_fallthru
      _
    %v49 = vld [vmem:[#allocation3] sm:$0xff]
    %v50 = vld [vmem:[#allocation3 + $0x8] sm:$0xff]
    %v51 = vld [vmem:[#allocation5] sm:$0xff]
    %v52 = vld [vmem:[#allocation5 + $0x8] sm:$0xff]
    %v53 = vsub.f32 %v49, %v51
    %v54 = vsub.f32 %v50, %v52
    %v55 = vld [vmem:[#allocation7] sm:$0xff]
    %v56 = vld [vmem:[#allocation7 + $0x8] sm:$0xff]
    %v57 = vmax.f32 %v55, 1e-06
    %v58 = vmax.f32 %v56, 1e-06
    %v59 = vmul.f32 %v53, %v53
    %v60 = vmul.f32 %v54, %v54
    %v61 = vrcp.pop %v57
    %v62 = vmul.f32 %v59, %v61
    %v63 = vrcp.pop %v58
    %v64 = vmul.f32 %v60, %v63
    %v65 = vadd.f32 %v57, %v62
    %v66 = vadd.f32 %v58, %v64
    %v67 = vmul.f32 %v65, 3.1415927
    %v68 = vmul.f32 %v66, 3.1415927
    %v69 = vlog2.pop %v67
    %v70 = vmul.f32 %v69, 0.6931472
    %v71 = vlog2.pop %v68
    %v72 = vmul.f32 %v71, 0.6931472
    %v75 = vcombine.high %v70, %v70
    %v77 = vunpack.c.l.s4 1983009808
    %v78 = vunpack.c.0.s8 %v77
    %v79 = vlaneseq
    %v80 = vshrl.u32 %v79, 7
    %v81 = vsub.s32 %v78, %v80
    %v82 = vrot.slane %v70, %v81
    %v84 = vunpack.c.l.s4 1983009808
    %v85 = vunpack.c.0.s8 %v84
    %v86 = vlaneseq
    %v87 = vshrl.u32 %v86, 7
    %v88 = vsub.s32 %v85, %v87
    %v89 = vrot.slane %v75, %v88
    %v90 = vcombine.high %v82, %v82
    %v91 = vcombine.high %v89, %v89
    %v92 = vcombine.high %v72, %v72
    %v94 = vunpack.c.l.s4 1983009808
    %v95 = vunpack.c.0.s8 %v94
    %v96 = vlaneseq
    %v97 = vshrl.u32 %v96, 7
    %v98 = vsub.s32 %v95, %v97
    %v99 = vrot.slane %v72, %v98
    %v101 = vunpack.c.l.s4 1983009808
    %v102 = vunpack.c.0.s8 %v101
    %v103 = vlaneseq
    %v104 = vshrl.u32 %v103, 7
    %v105 = vsub.s32 %v102, %v104
    %v106 = vrot.slane %v92, %v105
    %v107 = vcombine.high %v99, %v99
    %v108 = vcombine.high %v106, %v106
    %vm117 = vcmask 1041408
    %v118 = vsel %vm117, %v82, 0.0
    %v119 = vsel %vm117, %v90, 0.0
    %v120 = vadd.f32 %v118, %v119
    %v121 = vsel %vm117, %v89, 0.0
    %v122 = vadd.f32 %v120, %v121
    %v123 = vsel %vm117, %v91, 0.0
    %v124 = vadd.f32 %v122, %v123
    %v125 = vsel %vm117, %v99, 0.0
    %v126 = vadd.f32 %v124, %v125
    %v127 = vsel %vm117, %v107, 0.0
    %v128 = vadd.f32 %v126, %v127
    %v129 = vsel %vm117, %v106, 0.0
    %v130 = vadd.f32 %v128, %v129
    %v131 = vsel %vm117, %v108, 0.0
    %v132 = vadd.f32 %v130, %v131
    %133 = vadd.xlane.f32.xlu0 %v132
    %v134 = vpop.xlane.xlu0 %133
    %vm135 = vcmask 1024
    %136 = vst.msk [vmem:[%s3] sm:$0x3] %vm135, %v134
    // Predicated region
    $region26: #{tpu_custom_call.1} parent=1 // pred_check
      _
    $region27: #{tpu_custom_call.1} parent=1 // pred_check_branch
      %138 = sbr.rel (0) target = $region29
    $region28: #{tpu_custom_call.1} parent=1 // pred_region
      _
    $region29: #{tpu_custom_call.1} parent=1 // pred_fallthru
      _
    // Predicated region
    $region30: #{tpu_custom_call.1} parent=1 // pred_check
      _
    $region31: #{tpu_custom_call.1} parent=1 // pred_check_branch
      %140 = sbr.rel (0) target = $region33
    $region32: #{tpu_custom_call.1} parent=1 // pred_region
      _
    $region33: #{tpu_custom_call.1} parent=1 // pred_fallthru
      _
    %141 = vsyncpa [#allocation4], 1
    %142 = vsyncpa [#allocation6], 1

</llo_original>
